<compile_context>
chip_gen: v6e
topology: v6e:2x2x1
jax: 0.10.0
libtpu: 0.0.40
codegen_flags: <defaults>
</compile_context>

<pallas_src>
import functools

import jax
import jax.numpy as jnp
from jax.experimental import pallas as pl
from jax.experimental.pallas import tpu as pltpu

_LANES = 128
_THRESHOLD = 20.0  # PyTorch F.softplus default threshold


def _softplus_kernel(x_ref, o_ref, *, beta, inv_beta, eps, threshold):
    # NOTE: a partial trailing block may read undefined rows in the padding
    # region (possibly producing inf/nan there); those rows are never stored
    # back (masked writes), so results are unaffected. Do not "fix" this with
    # an extra copy.
    x = x_ref[...].astype(jnp.float32)
    bx = x if beta == 1.0 else x * beta
    # Branch-free numerically-stable softplus: max(z,0) + log1p(exp(-|z|)).
    sp = jnp.maximum(bx, 0.0) + jnp.log1p(jnp.exp(-jnp.abs(bx)))
    if beta != 1.0:
        sp = sp * inv_beta
    # Linear region: return x verbatim (not (beta*x)*(1/beta)) like PyTorch.
    sp = jnp.where(bx > threshold, x, sp)
    o_ref[...] = (sp + eps).astype(o_ref.dtype)


def _round_up(v, m):
    return ((v + m - 1) // m) * m


def _softplus_rows(x2d, *, beta, eps, target_tile_bytes):
    """Run the Pallas kernel over a (rows, 128) lane-dense slab."""
    rows, lanes = x2d.shape
    itemsize = jnp.dtype(x2d.dtype).itemsize
    # Minimum sublane multiple for the dtype (f32: 8, bf16/f16: 16, 8-bit: 32).
    min_sublane = {4: 8, 2: 16, 1: 32}.get(itemsize, 8)

    # Size the tile by bytes (~4 MiB) -> f32: 8192 rows, bf16: 16384 rows.
    br_bytes = max(
        min_sublane,
        (target_tile_bytes // (lanes * itemsize)) // min_sublane * min_sublane,
    )
    br = min(rows, br_bytes)

    # Megacore (v7x has 2 TensorCores): ensure large inputs produce at least
    # 2 (>=4 when very large) grid steps so the "parallel" axis shards work.
    total_bytes = rows * lanes * itemsize
    if total_bytes >= (1 << 20):
        min_steps = 4 if total_bytes >= (8 << 20) else 2
        br = min(br, _round_up(pl.cdiv(rows, min_steps), min_sublane))

    if br < rows:
        # Sub-full blocks must be a multiple of the dtype's sublane tiling.
        br = max(min_sublane, (br // min_sublane) * min_sublane)
    else:
        br = rows  # full-extent block is always legal

    grid = (pl.cdiv(rows, br),)

    kernel = functools.partial(
        _softplus_kernel,
        beta=float(beta),
        inv_beta=1.0 / float(beta),
        eps=float(eps),
        threshold=_THRESHOLD,
    )

    n = rows * lanes
    cost = pl.CostEstimate(
        flops=6 * n,
        transcendentals=2 * n,
        bytes_accessed=2 * n * itemsize,
    )

    return pl.pallas_call(
        kernel,
        out_shape=jax.ShapeDtypeStruct((rows, lanes), x2d.dtype),
        grid_spec=pltpu.PrefetchScalarGridSpec(
            num_scalar_prefetch=0,
            grid=grid,
            in_specs=[pl.BlockSpec((br, lanes), lambda i: (i, 0))],
            out_specs=pl.BlockSpec((br, lanes), lambda i: (i, 0)),
        ),
        compiler_params=pltpu.CompilerParams(
            dimension_semantics=("parallel",),
            # 2 in + 2 out double-buffers at <=4 MiB/tile = <=16 MiB; 32 MiB
            # scoped limit leaves headroom on every generation (v5e/v6e:
            # 128 MiB physical, v7x: 64 MiB physical).
            vmem_limit_bytes=32 << 20,
        ),
        cost_estimate=cost,
        # input_output_aliases={0: 0} could reuse the input HBM buffer for the
        # output (useful for huge activations); left off so callers keep x.
    )(x2d)


def _softplus_jnp(x, *, beta, eps):
    """Plain-JAX tail path (<128 leftover elements), identical semantics."""
    xf = x.astype(jnp.float32)
    bx = xf * beta
    sp = (jnp.maximum(bx, 0.0) + jnp.log1p(jnp.exp(-jnp.abs(bx)))) / beta
    sp = jnp.where(bx > _THRESHOLD, xf, sp)
    return (sp + eps).astype(x.dtype)


def constraint_forward(x, eps=1e-12, beta=1.0, target_tile_bytes=4 << 20):
    """softplus(x, beta) + eps elementwise via a Pallas TPU kernel.

    x: any-shaped float array (e.g. NCHW). Result has the same shape/dtype.
    """
    orig_shape = x.shape
    n = x.size
    if n == 0:
        return x

    x_flat = jnp.reshape(x, (-1,))
    n_bulk = (n // _LANES) * _LANES

    if n_bulk == n:
        # Fast path: exact lane multiple -> no padding copies at all.
        out2d = _softplus_rows(
            jnp.reshape(x_flat, (n // _LANES, _LANES)),
            beta=beta, eps=eps, target_tile_bytes=target_tile_bytes,
        )
        return jnp.reshape(out2d, orig_shape)

    # Ragged tail: kernel on the 128-aligned bulk, tiny remainder in plain
    # jnp — avoids materializing a padded copy of the whole array (which
    # would add full extra HBM read+write passes for a 2-pass mem-bound op).
    if n_bulk > 0:
        bulk2d = _softplus_rows(
            jnp.reshape(x_flat[:n_bulk], (n_bulk // _LANES, _LANES)),
            beta=beta, eps=eps, target_tile_bytes=target_tile_bytes,
        )
        tail = _softplus_jnp(x_flat[n_bulk:], beta=float(beta), eps=float(eps))
        out_flat = jnp.concatenate([jnp.reshape(bulk2d, (-1,)), tail])
    else:
        out_flat = _softplus_jnp(x_flat, beta=float(beta), eps=float(eps))
    return jnp.reshape(out_flat, orig_shape)


def _reference(x, beta=1.0, eps=1e-12, thr=_THRESHOLD):
    """Plain-JAX reference mirroring PyTorch F.softplus(x, beta) + eps."""
    bx = beta * x
    sp = (jnp.maximum(bx, 0.0) + jnp.log1p(jnp.exp(-jnp.abs(bx)))) / beta
    return jnp.where(bx > thr, x, sp) + eps


if __name__ == "__main__":
    key = jax.random.PRNGKey(0)

    # NCHW activation, small shapes consistent with the module's usage.
    x = jax.random.normal(key, (2, 4, 16, 16), dtype=jnp.float32) * 5.0
    out = jax.block_until_ready(constraint_forward(x, eps=1e-12, beta=1.0))
    ref = _reference(x, beta=1.0, eps=1e-12)
    assert out.shape == x.shape and out.dtype == x.dtype
    assert jnp.allclose(out, ref, rtol=1e-6, atol=1e-6)

    # Exercise the ragged-tail path (n % 128 != 0), beta != 1, linear region.
    x2 = jax.random.normal(jax.random.PRNGKey(0), (2, 3, 45),
                           dtype=jnp.float32) * 30.0
    out2 = jax.block_until_ready(constraint_forward(x2, eps=1e-12, beta=2.0))
    ref2 = _reference(x2, beta=2.0, eps=1e-12)
    assert out2.shape == x2.shape and out2.dtype == x2.dtype
    assert jnp.allclose(out2, ref2, rtol=1e-6, atol=1e-6)

    print("KERNEL_OK")
</pallas_src>

<mosaic_0001>
module attributes {stable_mosaic.version = 11 : i64} {
  func.func @_softplus_kernel(%arg0: i32, %arg1: memref<16x128xf32, #tpu.memory_space<vmem>>, %arg2: memref<16x128xf32, #tpu.memory_space<vmem>>) attributes {dimension_semantics = [#tpu.dimension_semantics<parallel>], iteration_bounds = array<i64: 1>, scalar_prefetch = 0 : i64, scratch_operands = 0 : i64, tpu.core_type = #tpu.core_type<tc>, window_params = [{transform_indices = @transform_0, window_bounds = array<i64: 16, 128>}, {transform_indices = @transform_1, window_bounds = array<i64: 16, 128>}]} {
    %c0 = arith.constant 0 : index
    %c0_0 = arith.constant 0 : index
    %0 = vector.load %arg1[%c0, %c0_0] : memref<16x128xf32, #tpu.memory_space<vmem>>, vector<16x128xf32>
    %cst = arith.constant 0.000000e+00 : f32
    %1 = vector.broadcast %cst : f32 to vector<16x128xf32>
    %2 = arith.maximumf %0, %1 : vector<16x128xf32>
    %3 = math.absf %0 : vector<16x128xf32>
    %cst_1 = arith.constant 0.000000e+00 : f32
    %4 = vector.broadcast %cst_1 : f32 to vector<16x128xf32>
    %5 = arith.subf %4, %3 : vector<16x128xf32>
    %6 = math.exp %5 : vector<16x128xf32>
    %7 = math.log1p %6 : vector<16x128xf32>
    %8 = arith.addf %2, %7 : vector<16x128xf32>
    %cst_2 = arith.constant 2.000000e+01 : f32
    %9 = vector.broadcast %cst_2 : f32 to vector<16x128xf32>
    %10 = arith.cmpf ogt, %0, %9 : vector<16x128xf32>
    %11 = arith.select %10, %0, %8 : vector<16x128xi1>, vector<16x128xf32>
    %cst_3 = arith.constant 9.99999996E-13 : f32
    %12 = vector.broadcast %cst_3 : f32 to vector<16x128xf32>
    %13 = arith.addf %11, %12 : vector<16x128xf32>
    %c0_4 = arith.constant 0 : index
    %c0_5 = arith.constant 0 : index
    %14 = vector.load %arg2[%c0_4, %c0_5] : memref<16x128xf32, #tpu.memory_space<vmem>>, vector<16x128xf32>
    tpu.vector_store %arg2[%c0_4, %c0_5], %13 {strides = array<i32>} : memref<16x128xf32, #tpu.memory_space<vmem>>, vector<16x128xf32>,
    return
  }
  func.func @transform_0(%arg0: i32) -> (i32, i32) {
    %c0_i32 = arith.constant 0 : i32
    %c0_i32_0 = arith.constant 0 : i32
    return %arg0, %c0_i32 : i32, i32
  }
  func.func @transform_1(%arg0: i32) -> (i32, i32) {
    %c0_i32 = arith.constant 0 : i32
    %c0_i32_0 = arith.constant 0 : i32
    return %arg0, %c0_i32 : i32, i32
  }
}

</mosaic_0001>

<llo_original>
// kernel: tpu_custom_call.1
$region0: #{tpu_custom_call.1}
  #allocation0 [shape = 'u32[]', space=smem, size = 0x4, offset = 0x4, fixed_abs, tag = 'smem constant byte address 0x4 - core index']
  #allocation1 [shape = 'u32[144,128]{1,0:T(1,128)}', space=vmem, size = 0x12000, scoped, tag = 'internal scratch']
  %s0 = inlined_call_operand.hbm [shape: f32[16,128], index: 0, kind: input, shape index: {}]
  %s1 = inlined_call_operand.hbm [shape: f32[16,128], index: 1, kind: output, shape index: {}]
  %s2 = sld [smem:[#allocation0]]
  $region18: #{tpu_custom_call.1} parent=0
    _
  %s4 = ssub.s32 1, %s2
  %s5 = scalar_select 0, %s4, %s2
  $region1: #{tpu_custom_call.1} parent=0
    #allocation2 [shape = 'u8[8192]{0}', space=vmem, size = 0x2000, scoped, tag = 'input window, operand 0, single buffered']
    #allocation3 [shape = 's32[1]{0}', space=sflag, size = 0x4, scoped, tag = 'scoped memory for tpu_custom_call.1']
    #allocation4 [shape = 's32[1]{0}', space=sflag, size = 0x4, scoped, tag = 'scoped memory for tpu_custom_call.1']
    #allocation5 [shape = 'u8[8192]{0}', space=vmem, size = 0x2000, scoped, tag = 'output window, operand 0, single buffered']
    %6 = vsyncpa [#allocation3], 0
    %7 = vsyncpa [#allocation4], 0
    // Predicated region
    $region2: #{tpu_custom_call.1} parent=1 // pred_check
      _
    $region3: #{tpu_custom_call.1} parent=1 // pred_check_branch
      %9 = sbr.rel (0) target = $region5
    $region4: #{tpu_custom_call.1} parent=1 // pred_region
      %s11 = ssub.s32 256, 256
      %12 = vsyncadd [#allocation3], %s11
      %s13 = sshll.u32 [#allocation2], 4
      %s14 = int_to_ptr.vmem [resolvable:$true] %s13
      %19 = dma.hbm_to_vmem [thread:$0]  %s0, 256, %s14, [#allocation3], 128, 128, 8
    $region5: #{tpu_custom_call.1} parent=1 // pred_fallthru
      _
    // Predicated region
    $region6: #{tpu_custom_call.1} parent=1 // pred_check
      _
    $region7: #{tpu_custom_call.1} parent=1 // pred_check_branch
      %21 = sbr.rel (0) target = $region9
    $region8: #{tpu_custom_call.1} parent=1 // pred_region
      %22 = dma.done [#allocation3], 256
    $region9: #{tpu_custom_call.1} parent=1 // pred_fallthru
      _
    %v23 = vld [vmem:[#allocation2] sm:$0xff]
    %v24 = vld [vmem:[#allocation2 + $0x8] sm:$0xff]
    %v25 = vmax.f32 %v23, 0.0
    %v26 = vmax.f32 %v24, 0.0
    %v27 = vand.u32 2147483647, %v23
    %v28 = vand.u32 2147483647, %v24
    %v29 = vsub.f32 0.0, %v27
    %v30 = vsub.f32 0.0, %v28
    %v31 = vmul.f32 %v29, 1.442695
    %v32 = vpow.pop %v31
    %v33 = vmul.f32 %v30, 1.442695
    %v34 = vpow.pop %v33
    %v35 = vadd.f32 %v32, 1.0
    %v36 = vlog2.pop %v35
    %v37 = vmul.f32 %v36, 0.6931472
    %v38 = vmul.f32 -0.5, %v32
    %v39 = vadd.f32 %v38, 1.0
    %v40 = vmul.f32 %v39, %v32
    %v41 = vand.u32 2147483647, %v32
    %vm42 = vcmp.lt.f32.partialorder %v41, 0.0004427343
    %v43 = vsel %vm42, %v40, %v37
    %v44 = vadd.f32 %v34, 1.0
    %v45 = vlog2.pop %v44
    %v46 = vmul.f32 %v45, 0.6931472
    %v47 = vmul.f32 -0.5, %v34
    %v48 = vadd.f32 %v47, 1.0
    %v49 = vmul.f32 %v48, %v34
    %v50 = vand.u32 2147483647, %v34
    %vm51 = vcmp.lt.f32.partialorder %v50, 0.0004427343
    %v52 = vsel %vm51, %v49, %v46
    %v53 = vadd.f32 %v25, %v43
    %v54 = vadd.f32 %v26, %v52
    %vm55 = vcmp.gt.f32.partialorder %v23, 20.0
    %vm56 = vcmp.gt.f32.partialorder %v24, 20.0
    %v57 = vsel %vm55, %v23, %v53
    %v58 = vsel %vm56, %v24, %v54
    %v59 = vadd.f32 %v57, 1e-12
    %v60 = vadd.f32 %v58, 1e-12
    %61 = vst [vmem:[#allocation5] sm:$0xff] %v59
    %62 = vst [vmem:[#allocation5 + $0x8] sm:$0xff] %v60
    // Predicated region
    $region10: #{tpu_custom_call.1} parent=1 // pred_check
      _
    $region11: #{tpu_custom_call.1} parent=1 // pred_check_branch
      %64 = sbr.rel (0) target = $region13
    $region12: #{tpu_custom_call.1} parent=1 // pred_region
      %s66 = ssub.s32 256, 256
      %67 = vsyncadd [#allocation4], %s66
      %s68 = sshll.u32 [#allocation5], 4
      %s69 = int_to_ptr.vmem [resolvable:$true] %s68
      %74 = dma.vmem_to_hbm [thread:$0]  %s69, 256, %s1, [#allocation4], 128, 128, 8
    $region13: #{tpu_custom_call.1} parent=1 // pred_fallthru
      _
    // Predicated region
    $region14: #{tpu_custom_call.1} parent=1 // pred_check
      _
    $region15: #{tpu_custom_call.1} parent=1 // pred_check_branch
      %76 = sbr.rel (0) target = $region17
    $region16: #{tpu_custom_call.1} parent=1 // pred_region
      %77 = dma.done [#allocation4], 256
    $region17: #{tpu_custom_call.1} parent=1 // pred_fallthru
      _
    %78 = vsyncpa [#allocation3], 1
    %79 = vsyncpa [#allocation4], 1

</llo_original>
